<compile_context>
chip_gen: v6e
topology: v6e:2x2x1
jax: 0.10.0
libtpu: 0.0.40
codegen_flags: <defaults>
</compile_context>

<pallas_src>
import functools

import jax
import jax.numpy as jnp
from jax import lax
from jax.experimental import pallas as pl
from jax.experimental.pallas import tpu as pltpu

_LANES = 128
_MAX_BLOCK_ROWS = 2048   # 2048 x 128 f32 = 1 MiB per input block
_NUM_CORE_SPLITS = 2     # parallel axis; sharded across TCs on v7x, sequential elsewhere
_ROW_ALIGN = 32          # block-row multiple; covers f32/bf16/int8 sublane packing


def _masked_l1_kernel(pred_ref, target_ref, sum_ref, cnt_ref, *,
                      inner_steps, block_rows, total_rows, needs_mask):
    c = pl.program_id(0)   # core-split (parallel) axis
    s = pl.program_id(1)   # streaming (arbitrary / reduction) axis

    @pl.when(s == 0)
    def _init():
        sum_ref[...] = jnp.zeros_like(sum_ref)
        cnt_ref[...] = jnp.zeros_like(cnt_ref)

    # upcast in-kernel (no-op for f32; halves HBM traffic for bf16 inputs)
    t = target_ref[...].astype(jnp.float32)
    p = pred_ref[...].astype(jnp.float32)

    valid = t > 0.0
    if needs_mask:
        # Mask rows past the logical end of the array (partial / clamped
        # blocks). `needs_mask` is a trace-time constant, so the aligned case
        # pays nothing for this.
        blk = c * inner_steps + s          # logical block index
        row_ids = blk * block_rows + lax.broadcasted_iota(
            jnp.int32, (block_rows, _LANES), 0)
        valid = jnp.logical_and(valid, row_ids < total_rows)

    absdiff = jnp.where(valid, jnp.abs(t - p), 0.0)
    ones = jnp.where(valid, 1.0, 0.0)

    # Per-lane partial sums: one sublane reduce per block, elementwise
    # accumulate into the resident (1, 1, 128) output blocks. The cross-lane
    # reduce happens once, in the wrapper.
    sum_part = jnp.sum(absdiff, axis=0, keepdims=True)   # (1, 128)
    cnt_part = jnp.sum(ones, axis=0, keepdims=True)      # (1, 128)
    sum_ref[...] += sum_part[None]                        # (1, 1, 128)
    cnt_ref[...] += cnt_part[None]


def masked_l1_loss(pred, target, weight=None):
    del weight  # unused, mirrors the PyTorch module's signature
    assert pred.ndim == target.ndim, "inconsistent dimensions"
    assert pred.shape == target.shape

    p = pred.reshape(-1)
    t = target.reshape(-1)
    n = p.shape[0]

    # Pad only to a multiple of 128 lanes (and only if needed). Padding the
    # target with 0 self-masks those elements. For typical image-like shapes
    # this branch is never taken, so no extra HBM pass.
    pad = (-n) % _LANES
    if pad:
        p = jnp.pad(p, (0, pad))
        t = jnp.pad(t, (0, pad))
    rows = (n + pad) // _LANES

    block_rows = min(_MAX_BLOCK_ROWS,
                     ((rows + _ROW_ALIGN - 1) // _ROW_ALIGN) * _ROW_ALIGN)
    num_blocks = pl.cdiv(rows, block_rows)
    inner_steps = pl.cdiv(num_blocks, _NUM_CORE_SPLITS)
    # Mask only needed if the last block is partial or the core split overshoots.
    needs_mask = (num_blocks * block_rows != rows) or \
                 (inner_steps * _NUM_CORE_SPLITS != num_blocks)

    p2 = p.reshape(rows, _LANES)
    t2 = t.reshape(rows, _LANES)

    def in_map(c, s):
        # Clamp so overshooting core-split steps never issue an OOB DMA;
        # their contribution is zeroed by the in-kernel row mask.
        return (jnp.minimum(c * inner_steps + s, num_blocks - 1), 0)

    kernel = functools.partial(
        _masked_l1_kernel,
        inner_steps=inner_steps,
        block_rows=block_rows,
        total_rows=rows,
        needs_mask=needs_mask,
    )

    sums, cnts = pl.pallas_call(
        kernel,
        out_shape=(
            jax.ShapeDtypeStruct((_NUM_CORE_SPLITS, 1, _LANES), jnp.float32),
            jax.ShapeDtypeStruct((_NUM_CORE_SPLITS, 1, _LANES), jnp.float32),
        ),
        grid_spec=pltpu.PrefetchScalarGridSpec(
            num_scalar_prefetch=0,
            grid=(_NUM_CORE_SPLITS, inner_steps),
            in_specs=[
                pl.BlockSpec((block_rows, _LANES), in_map),
                pl.BlockSpec((block_rows, _LANES), in_map),
            ],
            out_specs=[
                pl.BlockSpec((1, 1, _LANES), lambda c, s: (c, 0, 0)),
                pl.BlockSpec((1, 1, _LANES), lambda c, s: (c, 0, 0)),
            ],
        ),
        compiler_params=pltpu.CompilerParams(
            dimension_semantics=("parallel", "arbitrary")),
    )(p2, t2)

    total_sum = jnp.sum(sums)
    total_cnt = jnp.sum(cnts)
    # 0/0 -> NaN when no valid elements (matches torch mean of an empty tensor)
    return (total_sum / total_cnt).astype(jnp.float32)


def masked_l1_loss_ref(pred, target):
    p = pred.astype(jnp.float32)
    t = target.astype(jnp.float32)
    mask = t > 0
    diff = jnp.where(mask, jnp.abs(t - p), 0.0)
    return jnp.sum(diff) / jnp.sum(mask.astype(jnp.float32))


if __name__ == "__main__":
    key = jax.random.PRNGKey(0)
    k1, k2, k3, k4, k5, k6 = jax.random.split(key, 6)

    # depth-style inputs: batch=2, channels=1, spatial=16x16 (f32, 128-aligned)
    pred = jax.random.normal(k1, (2, 1, 16, 16), dtype=jnp.float32)
    target = jax.random.normal(k2, (2, 1, 16, 16), dtype=jnp.float32)
    loss = masked_l1_loss(pred, target)
    jax.block_until_ready(loss)
    ref = masked_l1_loss_ref(pred, target)
    assert jnp.allclose(loss, ref, rtol=1e-5, atol=1e-6), (loss, ref)

    # ragged shape (not a multiple of 128) -> exercises pad + in-kernel masking
    pred_r = jax.random.normal(k3, (2, 3, 17, 13), dtype=jnp.float32)
    target_r = jax.random.normal(k4, (2, 3, 17, 13), dtype=jnp.float32)
    loss_r = masked_l1_loss(pred_r, target_r)
    jax.block_until_ready(loss_r)
    ref_r = masked_l1_loss_ref(pred_r, target_r)
    assert jnp.allclose(loss_r, ref_r, rtol=1e-5, atol=1e-6), (loss_r, ref_r)

    # bf16 inputs -> exercises in-kernel upcast path
    pred_b = jax.random.normal(k5, (4, 2, 16, 16), dtype=jnp.bfloat16)
    target_b = jax.random.normal(k6, (4, 2, 16, 16), dtype=jnp.bfloat16)
    loss_b = masked_l1_loss(pred_b, target_b)
    jax.block_until_ready(loss_b)
    ref_b = masked_l1_loss_ref(pred_b, target_b)
    assert jnp.allclose(loss_b, ref_b, rtol=1e-4, atol=1e-5), (loss_b, ref_b)

    print("KERNEL_OK")
</pallas_src>

<mosaic_0001>
module attributes {stable_mosaic.version = 11 : i64} {
  func.func @_masked_l1_kernel(%arg0: i32, %arg1: i32, %arg2: memref<32x128xf32, #tpu.memory_space<vmem>>, %arg3: memref<32x128xf32, #tpu.memory_space<vmem>>, %arg4: memref<1x1x128xf32, #tpu.memory_space<vmem>>, %arg5: memref<1x1x128xf32, #tpu.memory_space<vmem>>) attributes {dimension_semantics = [#tpu.dimension_semantics<parallel>, #tpu.dimension_semantics<arbitrary>], iteration_bounds = array<i64: 2, 1>, scalar_prefetch = 0 : i64, scratch_operands = 0 : i64, tpu.core_type = #tpu.core_type<tc>, window_params = [{transform_indices = @transform_0, window_bounds = array<i64: 32, 128>}, {transform_indices = @transform_1, window_bounds = array<i64: 32, 128>}, {transform_indices = @transform_2, window_bounds = array<i64: 1, 1, 128>}, {transform_indices = @transform_3, window_bounds = array<i64: 1, 1, 128>}]} {
    %c0_i32 = arith.constant 0 : i32
    %0 = arith.cmpi eq, %arg1, %c0_i32 : i32
    %1 = arith.extui %0 : i1 to i32
    %c0_i32_0 = arith.constant 0 : i32
    %2 = arith.cmpi ne, %1, %c0_i32_0 : i32
    scf.if %2 {
      %cst_21 = arith.constant 0.000000e+00 : f32
      %35 = vector.broadcast %cst_21 : f32 to vector<1x1x128xf32>
      %c0_22 = arith.constant 0 : index
      %c0_23 = arith.constant 0 : index
      %c0_24 = arith.constant 0 : index
      %36 = vector.load %arg4[%c0_22, %c0_23, %c0_24] : memref<1x1x128xf32, #tpu.memory_space<vmem>>, vector<1x1x128xf32>
      tpu.vector_store %arg4[%c0_22, %c0_23, %c0_24], %35 {strides = array<i32>} : memref<1x1x128xf32, #tpu.memory_space<vmem>>, vector<1x1x128xf32>,
      %cst_25 = arith.constant 0.000000e+00 : f32
      %37 = vector.broadcast %cst_25 : f32 to vector<1x1x128xf32>
      %c0_26 = arith.constant 0 : index
      %c0_27 = arith.constant 0 : index
      %c0_28 = arith.constant 0 : index
      %38 = vector.load %arg5[%c0_26, %c0_27, %c0_28] : memref<1x1x128xf32, #tpu.memory_space<vmem>>, vector<1x1x128xf32>
      tpu.vector_store %arg5[%c0_26, %c0_27, %c0_28], %37 {strides = array<i32>} : memref<1x1x128xf32, #tpu.memory_space<vmem>>, vector<1x1x128xf32>,
    } else {
    }
    %c0 = arith.constant 0 : index
    %c0_1 = arith.constant 0 : index
    %3 = vector.load %arg3[%c0, %c0_1] : memref<32x128xf32, #tpu.memory_space<vmem>>, vector<32x128xf32>
    %c0_2 = arith.constant 0 : index
    %c0_3 = arith.constant 0 : index
    %4 = vector.load %arg2[%c0_2, %c0_3] : memref<32x128xf32, #tpu.memory_space<vmem>>, vector<32x128xf32>
    %cst = arith.constant 0.000000e+00 : f32
    %5 = vector.broadcast %cst : f32 to vector<32x128xf32>
    %6 = arith.cmpf ogt, %3, %5 : vector<32x128xf32>
    %c1_i32 = arith.constant 1 : i32
    %7 = arith.muli %arg0, %c1_i32 : i32
    %8 = arith.addi %7, %arg1 : i32
    %c32_i32 = arith.constant 32 : i32
    %9 = arith.muli %8, %c32_i32 : i32
    %10 = tpu.iota {dimensions = array<i32: 0>} : vector<32x128xi32>
    %11 = vector.broadcast %9 : i32 to vector<32x128xi32>
    %12 = arith.addi %11, %10 : vector<32x128xi32>
    %c4_i32 = arith.constant 4 : i32
    %13 = vector.broadcast %c4_i32 : i32 to vector<32x128xi32>
    %14 = arith.cmpi slt, %12, %13 : vector<32x128xi32>
    %15 = arith.andi %6, %14 : vector<32x128xi1>
    %16 = arith.subf %3, %4 : vector<32x128xf32>
    %17 = math.absf %16 : vector<32x128xf32>
    %cst_4 = arith.constant 0.000000e+00 : f32
    %18 = vector.broadcast %cst_4 : f32 to vector<32x128xf32>
    %19 = arith.select %15, %17, %18 : vector<32x128xi1>, vector<32x128xf32>
    %cst_5 = arith.constant 1.000000e+00 : f32
    %cst_6 = arith.constant 0.000000e+00 : f32
    %20 = vector.broadcast %cst_5 : f32 to vector<32x128xf32>
    %21 = vector.broadcast %cst_6 : f32 to vector<32x128xf32>
    %22 = arith.select %15, %20, %21 : vector<32x128xi1>, vector<32x128xf32>
    %cst_7 = arith.constant dense<0.000000e+00> : vector<128xf32>
    %23 = vector.multi_reduction <add>, %19, %cst_7 [0] : vector<32x128xf32> to vector<128xf32>
    %24 = vector.shape_cast %23 : vector<128xf32> to vector<1x128xf32>
    %cst_8 = arith.constant dense<0.000000e+00> : vector<128xf32>
    %25 = vector.multi_reduction <add>, %22, %cst_8 [0] : vector<32x128xf32> to vector<128xf32>
    %26 = vector.shape_cast %25 : vector<128xf32> to vector<1x128xf32>
    %c0_9 = arith.constant 0 : index
    %c0_10 = arith.constant 0 : index
    %c0_11 = arith.constant 0 : index
    %27 = vector.load %arg4[%c0_9, %c0_10, %c0_11] : memref<1x1x128xf32, #tpu.memory_space<vmem>>, vector<1x1x128xf32>
    %28 = vector.shape_cast %24 : vector<1x128xf32> to vector<1x1x128xf32>
    %29 = arith.addf %27, %28 : vector<1x1x128xf32>
    %c0_12 = arith.constant 0 : index
    %c0_13 = arith.constant 0 : index
    %c0_14 = arith.constant 0 : index
    %30 = vector.load %arg4[%c0_12, %c0_13, %c0_14] : memref<1x1x128xf32, #tpu.memory_space<vmem>>, vector<1x1x128xf32>
    tpu.vector_store %arg4[%c0_12, %c0_13, %c0_14], %29 {strides = array<i32>} : memref<1x1x128xf32, #tpu.memory_space<vmem>>, vector<1x1x128xf32>,
    %c0_15 = arith.constant 0 : index
    %c0_16 = arith.constant 0 : index
    %c0_17 = arith.constant 0 : index
    %31 = vector.load %arg5[%c0_15, %c0_16, %c0_17] : memref<1x1x128xf32, #tpu.memory_space<vmem>>, vector<1x1x128xf32>
    %32 = vector.shape_cast %26 : vector<1x128xf32> to vector<1x1x128xf32>
    %33 = arith.addf %31, %32 : vector<1x1x128xf32>
    %c0_18 = arith.constant 0 : index
    %c0_19 = arith.constant 0 : index
    %c0_20 = arith.constant 0 : index
    %34 = vector.load %arg5[%c0_18, %c0_19, %c0_20] : memref<1x1x128xf32, #tpu.memory_space<vmem>>, vector<1x1x128xf32>
    tpu.vector_store %arg5[%c0_18, %c0_19, %c0_20], %33 {strides = array<i32>} : memref<1x1x128xf32, #tpu.memory_space<vmem>>, vector<1x1x128xf32>,
    return
  }
  func.func @transform_0(%arg0: i32, %arg1: i32) -> (i32, i32) {
    %c1_i32 = arith.constant 1 : i32
    %0 = arith.muli %arg0, %c1_i32 : i32
    %1 = arith.addi %0, %arg1 : i32
    %c0_i32 = arith.constant 0 : i32
    %2 = arith.minsi %1, %c0_i32 : i32
    %c0_i32_0 = arith.constant 0 : i32
    %c0_i32_1 = arith.constant 0 : i32
    return %2, %c0_i32_0 : i32, i32
  }
  func.func @transform_1(%arg0: i32, %arg1: i32) -> (i32, i32) {
    %c1_i32 = arith.constant 1 : i32
    %0 = arith.muli %arg0, %c1_i32 : i32
    %1 = arith.addi %0, %arg1 : i32
    %c0_i32 = arith.constant 0 : i32
    %2 = arith.minsi %1, %c0_i32 : i32
    %c0_i32_0 = arith.constant 0 : i32
    %c0_i32_1 = arith.constant 0 : i32
    return %2, %c0_i32_0 : i32, i32
  }
  func.func @transform_2(%arg0: i32, %arg1: i32) -> (i32, i32, i32) {
    %c0_i32 = arith.constant 0 : i32
    %c0_i32_0 = arith.constant 0 : i32
    %c0_i32_1 = arith.constant 0 : i32
    return %arg0, %c0_i32, %c0_i32_0 : i32, i32, i32
  }
  func.func @transform_3(%arg0: i32, %arg1: i32) -> (i32, i32, i32) {
    %c0_i32 = arith.constant 0 : i32
    %c0_i32_0 = arith.constant 0 : i32
    %c0_i32_1 = arith.constant 0 : i32
    return %arg0, %c0_i32, %c0_i32_0 : i32, i32, i32
  }
}

</mosaic_0001>

<llo_original>
// kernel: tpu_custom_call.1
$region0: #{tpu_custom_call.1}
  #allocation0 [shape = 'u32[]', space=smem, size = 0x4, offset = 0x4, fixed_abs, tag = 'smem constant byte address 0x4 - core index']
  #allocation1 [shape = 'u32[144,128]{1,0:T(1,128)}', space=vmem, size = 0x12000, scoped, tag = 'internal scratch']
  %s0 = inlined_call_operand.hbm [shape: f32[4,128], index: 0, kind: input, shape index: {}]
  %s1 = inlined_call_operand.hbm [shape: f32[4,128], index: 1, kind: input, shape index: {}]
  %s2 = inlined_call_operand.hbm [shape: f32[2,1,128], index: 2, kind: output, shape index: {0}]
  %s3 = inlined_call_operand.hbm [shape: f32[2,1,128], index: 3, kind: output, shape index: {1}]
  %4 = xla_tuple %s2, %s3
  %s5 = sld [smem:[#allocation0]]
  $region61: #{tpu_custom_call.1} parent=0
    _
  %s7 = ssub.s32 1, %s5
  %s8 = scalar_select 0, %s7, %s5
  $region1: #{tpu_custom_call.1} parent=0
    #allocation2 [shape = 'u8[32768]{0}', space=vmem, size = 0x8000, scoped, tag = 'input window, operand 0']
    #allocation3 [shape = 's32[2]{0}', space=sflag, size = 0x8, scoped, tag = 'scoped memory for tpu_custom_call.1']
    #allocation4 [shape = 's32[2]{0}', space=sflag, size = 0x8, scoped, tag = 'scoped memory for tpu_custom_call.1']
    #allocation5 [shape = 'u8[32768]{0}', space=vmem, size = 0x8000, scoped, tag = 'input window, operand 1']
    #allocation6 [shape = 's32[2]{0}', space=sflag, size = 0x8, scoped, tag = 'scoped memory for tpu_custom_call.1']
    #allocation7 [shape = 'u8[1024]{0}', space=vmem, size = 0x400, scoped, tag = 'output window, operand 0']
    #allocation8 [shape = 'u8[1024]{0}', space=vmem, size = 0x400, scoped, tag = 'output window, operand 1']
    #allocation9 [shape = 's32[2]{0}', space=sflag, size = 0x8, scoped, tag = 'scoped memory for tpu_custom_call.1']
    %9 = vsyncpa [#allocation3], 0
    %s10 = scalar_lea.sflag [#allocation3], 1
    %11 = vsyncpa %s10, 0
    %12 = vsyncpa [#allocation6], 0
    %s13 = scalar_lea.sflag [#allocation6], 1
    %14 = vsyncpa %s13, 0
    %15 = vsyncpa [#allocation4], 0
    %s16 = scalar_lea.sflag [#allocation4], 1
    %17 = vsyncpa %s16, 0
    %18 = vsyncpa [#allocation9], 0
    %s19 = scalar_lea.sflag [#allocation9], 1
    %20 = vsyncpa %s19, 0
    loop: start=0, step=1, limit=4
    $region2: #{tpu_custom_call.1} parent=1 // loop_pre_header
      _
    $region3: #{tpu_custom_call.1} parent=1 // loop_header
      %s22 = sphi 0, %s26
      %p23 = scmp.ge.s32.totalorder %s22, 4
      %s29 = sphi 0, %s41
      %s30 = sphi 0, %s37
      %s31 = sphi 0, %s29
      %s32 = sphi 0, %s30
      %s33 = sphi 0, %s31
      %s34 = sphi 0, %s32
      %s50 = sphi 0, %s52
      %s53 = sphi 0, %s50
      %s54 = sphi 0, %s53
      %s70 = sphi 0, %s54
      %s82 = sphi 0, %s84
      %s85 = sphi 0, %s82
      %s86 = sphi 0, %s85
      %s102 = sphi 0, %s86
      %s108 = sphi 0, %s110
      %s111 = sphi 0, %s108
      %s112 = sphi 0, %s111
      %s128 = sphi 0, %s112
      %s134 = sphi 0, %s136
      %s137 = sphi 0, %s134
      %s138 = sphi 0, %s137
      %s154 = sphi 0, %s138
    $region4: #{tpu_custom_call.1} parent=1 // loop_header_branch
      %25 = sbr.rel (%p23) target = $region8
    $region5: #{tpu_custom_call.1} parent=1 // loop_body
      %s27 = ssub.s32 %s22, 1
      %s28 = ssub.s32 %s22, 2
      %s35 = sadd.s32 1, %s30
      %p36 = scmp.ge.s32.totalorder %s35, 1
      %s37 = scalar_select %p36, 0, %s35
      %s38 = sadd.s32 1, %s29
      %s39 = scalar_select %p36, %s38, %s29
      %p40 = scmp.ge.s32.totalorder %s39, 2
      %s41 = scalar_select %p40, 0, %s39
      %s42 = sadd.s32 %s29, %s30
      %p43 = scmp.lt.s32.totalorder %s42, 0
      %s44 = scalar_select %p43, %s42, 0
      %s45 = sadd.s32 %s41, %s37
      %p46 = scmp.lt.s32.totalorder %s45, 0
      %s47 = scalar_select %p46, %s45, 0
      %s48 = ssub.s32 %s44, %s47
      %p49 = scmp.eq.s32.totalorder %s48, 0
      %s51 = sadd.s32 %s50, 1
      %s52 = scalar_select %p49, %s50, %s51
      %p55 = pneg %p49
      %p56 = scmp.eq.s32.totalorder %s22, 1
      %p57 = por %p55, %p56
      %p58 = scmp.ne.s32.totalorder %s50, %s53
      %p59 = scmp.eq.s32.totalorder %s22, 0
      %p60 = por %p58, %p59
      %p61 = scmp.ne.s32.totalorder %s50, %s53
      %p62 = scmp.eq.s32.totalorder %s27, 1
      %p63 = por %p61, %p62
      %p64 = scmp.ne.s32.totalorder %s53, %s54
      %p65 = scmp.eq.s32.totalorder %s27, 0
      %p66 = por %p64, %p65
      %p67 = scmp.ne.s32.totalorder %s53, %s54
      %p68 = scmp.eq.s32.totalorder %s28, 1
      %p69 = por %p67, %p68
      %p71 = scmp.ne.s32.totalorder %s54, %s70
      %p72 = scmp.eq.s32.totalorder %s28, 0
      %p73 = por %p71, %p72
      %s74 = sadd.s32 %s29, %s30
      %p75 = scmp.lt.s32.totalorder %s74, 0
      %s76 = scalar_select %p75, %s74, 0
      %s77 = sadd.s32 %s41, %s37
      %p78 = scmp.lt.s32.totalorder %s77, 0
      %s79 = scalar_select %p78, %s77, 0
      %s80 = ssub.s32 %s76, %s79
      %p81 = scmp.eq.s32.totalorder %s80, 0
      %s83 = sadd.s32 %s82, 1
      %s84 = scalar_select %p81, %s82, %s83
      %p87 = pneg %p81
      %p88 = scmp.eq.s32.totalorder %s22, 1
      %p89 = por %p87, %p88
      %p90 = scmp.ne.s32.totalorder %s82, %s85
      %p91 = scmp.eq.s32.totalorder %s22, 0
      %p92 = por %p90, %p91
      %p93 = scmp.ne.s32.totalorder %s82, %s85
      %p94 = scmp.eq.s32.totalorder %s27, 1
      %p95 = por %p93, %p94
      %p96 = scmp.ne.s32.totalorder %s85, %s86
      %p97 = scmp.eq.s32.totalorder %s27, 0
      %p98 = por %p96, %p97
      %p99 = scmp.ne.s32.totalorder %s85, %s86
      %p100 = scmp.eq.s32.totalorder %s28, 1
      %p101 = por %p99, %p100
      %p103 = scmp.ne.s32.totalorder %s86, %s102
      %p104 = scmp.eq.s32.totalorder %s28, 0
      %p105 = por %p103, %p104
      %s106 = ssub.s32 %s29, %s41
      %p107 = scmp.eq.s32.totalorder %s106, 0
      %s109 = sadd.s32 %s108, 1
      %s110 = scalar_select %p107, %s108, %s109
      %p113 = pneg %p107
      %p114 = scmp.eq.s32.totalorder %s22, 1
      %p115 = por %p113, %p114
      %p116 = scmp.ne.s32.totalorder %s108, %s111
      %p117 = scmp.eq.s32.totalorder %s22, 0
      %p118 = por %p116, %p117
      %p119 = scmp.ne.s32.totalorder %s108, %s111
      %p120 = scmp.eq.s32.totalorder %s27, 1
      %p121 = por %p119, %p120
      %p122 = scmp.ne.s32.totalorder %s111, %s112
      %p123 = scmp.eq.s32.totalorder %s27, 0
      %p124 = por %p122, %p123
      %p125 = scmp.ne.s32.totalorder %s111, %s112
      %p126 = scmp.eq.s32.totalorder %s28, 1
      %p127 = por %p125, %p126
      %p129 = scmp.ne.s32.totalorder %s112, %s128
      %p130 = scmp.eq.s32.totalorder %s28, 0
      %p131 = por %p129, %p130
      %s132 = ssub.s32 %s29, %s41
      %p133 = scmp.eq.s32.totalorder %s132, 0
      %s135 = sadd.s32 %s134, 1
      %s136 = scalar_select %p133, %s134, %s135
      %p139 = pneg %p133
      %p140 = scmp.eq.s32.totalorder %s22, 1
      %p141 = por %p139, %p140
      %p142 = scmp.ne.s32.totalorder %s134, %s137
      %p143 = scmp.eq.s32.totalorder %s22, 0
      %p144 = por %p142, %p143
      %p145 = scmp.ne.s32.totalorder %s134, %s137
      %p146 = scmp.eq.s32.totalorder %s27, 1
      %p147 = por %p145, %p146
      %p148 = scmp.ne.s32.totalorder %s137, %s138
      %p149 = scmp.eq.s32.totalorder %s27, 0
      %p150 = por %p148, %p149
      %p151 = scmp.ne.s32.totalorder %s137, %s138
      %p152 = scmp.eq.s32.totalorder %s28, 1
      %p153 = por %p151, %p152
      %p155 = scmp.ne.s32.totalorder %s138, %s154
      %p156 = scmp.eq.s32.totalorder %s28, 0
      %p157 = por %p155, %p156
      %p158 = scmp.le.s32.totalorder 1, %s22
      %p159 = scmp.lt.s32.totalorder %s22, 3
      %p160 = pnand %p158, %p159
      %p161 = pneg %p160
      // Predicated region
      $region9: #{tpu_custom_call.1} parent=5 // pred_check
        _
      $region10: #{tpu_custom_call.1} parent=5 // pred_check_branch
        %163 = sbr.rel (%p160) target = $region12
      $region11: #{tpu_custom_call.1} parent=5 // pred_region
        %s164 = ssub.s32 %s22, 1
      $region12: #{tpu_custom_call.1} parent=5 // pred_fallthru
        _
      %p165 = scmp.lt.s32.totalorder %s22, 2
      // Predicated region
      $region13: #{tpu_custom_call.1} parent=5 // pred_check
        %p166 = pneg %p165
      $region14: #{tpu_custom_call.1} parent=5 // pred_check_branch
        %168 = sbr.rel (%p166) target = $region16
      $region15: #{tpu_custom_call.1} parent=5 // pred_region
        // Predicated region
        $region17: #{tpu_custom_call.1} parent=15 // pred_check
          %p169 = pneg %p60
        $region18: #{tpu_custom_call.1} parent=15 // pred_check_branch
          %171 = sbr.rel (%p169) target = $region20
        $region19: #{tpu_custom_call.1} parent=15 // pred_region
          %s172 = sand.u32 %s50, 1
          %s173 = scalar_lea.sflag [#allocation3], %s172
          %s174 = sand.u32 %s50, 1
          %s175 = smul.addr %s174, 32
          %s176 = scalar_lea.vmem [#allocation2], %s175
          %s177 = sadd.s32 %s29, %s30
          %p178 = scmp.lt.s32.totalorder %s177, 0
          %s179 = scalar_select %p178, %s177, 0
          %s180 = smul.u32 8, %s179
          %s181 = ssub.s32 1, %s180
          %s182 = smul.u32 64, %s181
          %s184 = ssub.s32 512, %s182
          %185 = vsyncadd %s173, %s184
          %p186 = scmp.ne.s32.totalorder 0, %s182
          %s187 = smul.addr %s180, 64
          %s188 = scalar_lea.hbm %s0, %s187
          %s189 = smul.u32 4, %s181
          %s190 = sshll.u32 %s176, 4
          %s191 = int_to_ptr.vmem [resolvable:$true] %s190
          %s192 = sshll.u32 %s189, 4
          %196 = dma.hbm_to_vmem [thread:$0]  (%p186), %s188, %s192, %s191, %s173, 64, 64, 4
        $region20: #{tpu_custom_call.1} parent=15 // pred_fallthru
          _
        // Predicated region
        $region21: #{tpu_custom_call.1} parent=15 // pred_check
          %p197 = pneg %p92
        $region22: #{tpu_custom_call.1} parent=15 // pred_check_branch
          %199 = sbr.rel (%p197) target = $region24
        $region23: #{tpu_custom_call.1} parent=15 // pred_region
          %s200 = sand.u32 %s82, 1
          %s201 = scalar_lea.sflag [#allocation6], %s200
          %s202 = sand.u32 %s82, 1
          %s203 = smul.addr %s202, 32
          %s204 = scalar_lea.vmem [#allocation5], %s203
          %s205 = sadd.s32 %s29, %s30
          %p206 = scmp.lt.s32.totalorder %s205, 0
          %s207 = scalar_select %p206, %s205, 0
          %s208 = smul.u32 8, %s207
          %s209 = ssub.s32 1, %s208
          %s210 = smul.u32 64, %s209
          %s212 = ssub.s32 512, %s210
          %213 = vsyncadd %s201, %s212
          %p214 = scmp.ne.s32.totalorder 0, %s210
          %s215 = smul.addr %s208, 64
          %s216 = scalar_lea.hbm %s1, %s215
          %s217 = smul.u32 4, %s209
          %s218 = sshll.u32 %s204, 4
          %s219 = int_to_ptr.vmem [resolvable:$true] %s218
          %s220 = sshll.u32 %s217, 4
          %224 = dma.hbm_to_vmem [thread:$0]  (%p214), %s216, %s220, %s219, %s201, 64, 64, 4
        $region24: #{tpu_custom_call.1} parent=15 // pred_fallthru
          _
      $region16: #{tpu_custom_call.1} parent=5 // pred_fallthru
        _
      %p225 = scmp.le.s32.totalorder 1, %s22
      %p226 = scmp.lt.s32.totalorder %s22, 3
      %p227 = pnand %p225, %p226
      %p228 = pneg %p227
      // Predicated region
      $region25: #{tpu_custom_call.1} parent=5 // pred_check
        _
      $region26: #{tpu_custom_call.1} parent=5 // pred_check_branch
        %230 = sbr.rel (%p227) target = $region28
      $region27: #{tpu_custom_call.1} parent=5 // pred_region
        %s231 = ssub.s32 %s22, 1
        %s232 = sand.u32 %s53, 1
        %s233 = scalar_lea.sflag [#allocation3], %s232
        %s234 = sand.u32 %s53, 1
        %s235 = smul.addr %s234, 32
        %s236 = scalar_lea.vmem [#allocation2], %s235
        // Predicated region
        $region29: #{tpu_custom_call.1} parent=27 // pred_check
          %p237 = pneg %p66
        $region30: #{tpu_custom_call.1} parent=27 // pred_check_branch
          %239 = sbr.rel (%p237) target = $region32
        $region31: #{tpu_custom_call.1} parent=27 // pred_region
          %240 = dma.done %s233, 512
        $region32: #{tpu_custom_call.1} parent=27 // pred_fallthru
          _
        %s241 = sand.u32 %s85, 1
        %s242 = scalar_lea.sflag [#allocation6], %s241
        %s243 = sand.u32 %s85, 1
        %s244 = smul.addr %s243, 32
        %s245 = scalar_lea.vmem [#allocation5], %s244
        // Predicated region
        $region33: #{tpu_custom_call.1} parent=27 // pred_check
          %p246 = pneg %p98
        $region34: #{tpu_custom_call.1} parent=27 // pred_check_branch
          %248 = sbr.rel (%p246) target = $region36
        $region35: #{tpu_custom_call.1} parent=27 // pred_region
          %249 = dma.done %s242, 512
        $region36: #{tpu_custom_call.1} parent=27 // pred_fallthru
          _
        %s250 = sand.u32 %s53, 1
        %s251 = scalar_lea.sflag [#allocation3], %s250
        %s252 = sand.u32 %s53, 1
        %s253 = smul.addr %s252, 32
        %s254 = scalar_lea.vmem [#allocation2], %s253
        %p255 = pneg %p66
        %p256 = pneg %p63
        %s257 = sand.u32 %s85, 1
        %s258 = scalar_lea.sflag [#allocation6], %s257
        %s259 = sand.u32 %s85, 1
        %s260 = smul.addr %s259, 32
        %s261 = scalar_lea.vmem [#allocation5], %s260
        %p262 = pneg %p98
        %p263 = pneg %p95
        %p264 = pneg %p124
        %p265 = pneg %p121
        %s266 = sand.u32 %s111, 1
        %s267 = scalar_lea.sflag [#allocation4], %s266
        %s268 = sand.u32 %s111, 1
        %s269 = scalar_lea.vmem [#allocation7], %s268
        %p270 = pneg %p150
        %p271 = pneg %p147
        %s272 = sand.u32 %s137, 1
        %s273 = scalar_lea.sflag [#allocation9], %s272
        %s274 = sand.u32 %s137, 1
        %s275 = scalar_lea.vmem [#allocation8], %s274
        %s276 = sadd.s32 %s31, %s32
        %p277 = scmp.lt.s32.totalorder %s276, 0
        %s278 = scalar_select %p277, %s276, 0
        %s279 = smul.u32 8, %s278
        %s280 = ssub.s32 1, %s279
        %s281 = smul.u32 64, %s280
        %s282 = sadd.s32 %s31, %s32
        %p283 = scmp.lt.s32.totalorder %s282, 0
        %s284 = scalar_select %p283, %s282, 0
        %s285 = smul.u32 8, %s284
        %s286 = ssub.s32 1, %s285
        %s287 = smul.u32 64, %s286
        %p288 = scmp.eq.s32.totalorder %s32, 0
        // Predicated region
        $region37: #{tpu_custom_call.1} parent=27 // pred_check
          %p289 = pneg %p288
        $region38: #{tpu_custom_call.1} parent=27 // pred_check_branch
          %291 = sbr.rel (%p289) target = $region40
        $region39: #{tpu_custom_call.1} parent=27 // pred_region
          %292 = vst [vmem:[%s269] sm:$0x1] 0.0
          %293 = vst [vmem:[%s275] sm:$0x1] 0.0
        $region40: #{tpu_custom_call.1} parent=27 // pred_fallthru
          _
        %v294 = vld [vmem:[%s245] sm:$0xff]
        %v295 = vld [vmem:[%s245 + $0x8] sm:$0xff]
        %v296 = vld [vmem:[%s245 + $0x10] sm:$0xff]
        %v297 = vld [vmem:[%s245 + $0x18] sm:$0xff]
        %v298 = vld [vmem:[%s236] sm:$0xff]
        %v299 = vld [vmem:[%s236 + $0x8] sm:$0xff]
        %v300 = vld [vmem:[%s236 + $0x10] sm:$0xff]
        %v301 = vld [vmem:[%s236 + $0x18] sm:$0xff]
        %vm302 = vcmp.gt.f32.partialorder %v294, 0.0
        %vm303 = vcmp.gt.f32.partialorder %v295, 0.0
        %vm304 = vcmp.gt.f32.partialorder %v296, 0.0
        %vm305 = vcmp.gt.f32.partialorder %v297, 0.0
        %s306 = sadd.s32 %s31, %s32
        %s307 = smul.u32 %s306, 32
        %v308 = vlaneseq
        %v309 = vshrl.u32 %v308, 7
        %v310 = vadd.s32 %v309, 8
        %v311 = vadd.s32 %v309, 16
        %v312 = vadd.s32 %v309, 24
        %v313 = vstv %s307
        %v314 = vadd.s32 %v313, %v309
        %v315 = vadd.s32 %v313, %v310
        %v316 = vadd.s32 %v313, %v311
        %v317 = vadd.s32 %v313, %v312
        %vm318 = vcmp.lt.s32.totalorder %v314, 4
        %vm319 = vcmp.lt.s32.totalorder %v315, 4
        %vm320 = vcmp.lt.s32.totalorder %v316, 4
        %vm321 = vcmp.lt.s32.totalorder %v317, 4
        %vm322 = vmand %vm302, %vm318
        %vm323 = vmand %vm303, %vm319
        %vm324 = vmand %vm304, %vm320
        %vm325 = vmand %vm305, %vm321
        %v326 = vsub.f32 %v294, %v298
        %v327 = vsub.f32 %v295, %v299
        %v328 = vsub.f32 %v296, %v300
        %v329 = vsub.f32 %v297, %v301
        %v330 = vand.u32 2147483647, %v326
        %v331 = vand.u32 2147483647, %v327
        %v332 = vand.u32 2147483647, %v328
        %v333 = vand.u32 2147483647, %v329
        %v334 = vsel %vm322, %v330, 0.0
        %v335 = vsel %vm323, %v331, 0.0
        %v336 = vsel %vm324, %v332, 0.0
        %v337 = vsel %vm325, %v333, 0.0
        %v338 = vsel %vm322, 1.0, 0.0
        %v339 = vsel %vm323, 1.0, 0.0
        %v340 = vsel %vm324, 1.0, 0.0
        %v341 = vsel %vm325, 1.0, 0.0
        %v342 = vadd.f32 %v334, %v335
        %v343 = vadd.f32 %v342, %v336
        %v344 = vadd.f32 %v343, %v337
        %v345 = vrot.slane %v344, 4
        %v346 = vadd.f32 %v344, %v345
        %v347 = vrot.slane %v346, 2
        %v348 = vadd.f32 %v346, %v347
        %v349 = vrot.slane %v348, 1
        %v350 = vadd.f32 %v348, %v349
        %v351 = vadd.f32 %v338, %v339
        %v352 = vadd.f32 %v351, %v340
        %v353 = vadd.f32 %v352, %v341
        %v354 = vrot.slane %v353, 4
        %v355 = vadd.f32 %v353, %v354
        %v356 = vrot.slane %v355, 2
        %v357 = vadd.f32 %v355, %v356
        %v358 = vrot.slane %v357, 1
        %v359 = vadd.f32 %v357, %v358
        %v360 = vld [vmem:[%s269] sm:$0x1]
        %v361 = vadd.f32 %v360, %v350
        %362 = vst [vmem:[%s269] sm:$0x1] %v361
        %v363 = vld [vmem:[%s275] sm:$0x1]
        %v364 = vadd.f32 %v363, %v359
        %365 = vst [vmem:[%s275] sm:$0x1] %v364
        %s366 = sand.u32 %s111, 1
        %s367 = scalar_lea.sflag [#allocation4], %s366
        %s368 = sand.u32 %s111, 1
        %s369 = scalar_lea.vmem [#allocation7], %s368
        %s370 = sand.u32 %s137, 1
        %s371 = scalar_lea.sflag [#allocation9], %s370
        %s372 = sand.u32 %s137, 1
        %s373 = scalar_lea.vmem [#allocation8], %s372
        // Predicated region
        $region41: #{tpu_custom_call.1} parent=27 // pred_check
          %p374 = pneg %p121
        $region42: #{tpu_custom_call.1} parent=27 // pred_check_branch
          %376 = sbr.rel (%p374) target = $region44
        $region43: #{tpu_custom_call.1} parent=27 // pred_region
          %s378 = ssub.s32 16, 16
          %379 = vsyncadd %s367, %s378
          %s380 = smul.addr %s31, 16
          %s381 = scalar_lea.hbm %s2, %s380
          %s383 = sshll.u32 %s369, 4
          %s384 = int_to_ptr.vmem [resolvable:$true] %s383
          %386 = dma.vmem_to_hbm [thread:$0]  %s384, 16, %s381, %s367
        $region44: #{tpu_custom_call.1} parent=27 // pred_fallthru
          _
        // Predicated region
        $region45: #{tpu_custom_call.1} parent=27 // pred_check
          %p387 = pneg %p147
        $region46: #{tpu_custom_call.1} parent=27 // pred_check_branch
          %389 = sbr.rel (%p387) target = $region48
        $region47: #{tpu_custom_call.1} parent=27 // pred_region
          %s391 = ssub.s32 16, 16
          %392 = vsyncadd %s371, %s391
          %s393 = smul.addr %s31, 16
          %s394 = scalar_lea.hbm %s3, %s393
          %s396 = sshll.u32 %s373, 4
          %s397 = int_to_ptr.vmem [resolvable:$true] %s396
          %399 = dma.vmem_to_hbm [thread:$0]  %s397, 16, %s394, %s371
        $region48: #{tpu_custom_call.1} parent=27 // pred_fallthru
          _
      $region28: #{tpu_custom_call.1} parent=5 // pred_fallthru
        _
      %p400 = scmp.le.s32.totalorder 2, %s22
      // Predicated region
      $region49: #{tpu_custom_call.1} parent=5 // pred_check
        %p401 = pneg %p400
      $region50: #{tpu_custom_call.1} parent=5 // pred_check_branch
        %403 = sbr.rel (%p401) target = $region52
      $region51: #{tpu_custom_call.1} parent=5 // pred_region
        %s404 = ssub.s32 %s22, 2
        // Predicated region
        $region53: #{tpu_custom_call.1} parent=51 // pred_check
          %p405 = pneg %p127
        $region54: #{tpu_custom_call.1} parent=51 // pred_check_branch
          %407 = sbr.rel (%p405) target = $region56
        $region55: #{tpu_custom_call.1} parent=51 // pred_region
          %s408 = sand.u32 %s112, 1
          %s409 = scalar_lea.sflag [#allocation4], %s408
          %s410 = sand.u32 %s112, 1
          %s411 = scalar_lea.vmem [#allocation7], %s410
          %412 = dma.done %s409, 16
        $region56: #{tpu_custom_call.1} parent=51 // pred_fallthru
          _
        // Predicated region
        $region57: #{tpu_custom_call.1} parent=51 // pred_check
          %p413 = pneg %p153
        $region58: #{tpu_custom_call.1} parent=51 // pred_check_branch
          %415 = sbr.rel (%p413) target = $region60
        $region59: #{tpu_custom_call.1} parent=51 // pred_region
          %s416 = sand.u32 %s138, 1
          %s417 = scalar_lea.sflag [#allocation9], %s416
          %s418 = sand.u32 %s138, 1
          %s419 = scalar_lea.vmem [#allocation8], %s418
          %420 = dma.done %s417, 16
        $region60: #{tpu_custom_call.1} parent=51 // pred_fallthru
          _
      $region52: #{tpu_custom_call.1} parent=5 // pred_fallthru
        _
    $region6: #{tpu_custom_call.1} parent=1 // loop_footer
      %s26 = sadd.s32 1, %s22
    $region7: #{tpu_custom_call.1} parent=1 // loop_footer_branch
      %21 = sbr.rel target = $region3
    $region8: #{tpu_custom_call.1} parent=1 // loop_exit
      _
    %421 = vsyncpa [#allocation3], 1
    %s422 = scalar_lea.sflag [#allocation3], 1
    %423 = vsyncpa %s422, 1
    %424 = vsyncpa [#allocation6], 1
    %s425 = scalar_lea.sflag [#allocation6], 1
    %426 = vsyncpa %s425, 1
    %427 = vsyncpa [#allocation4], 1
    %s428 = scalar_lea.sflag [#allocation4], 1
    %429 = vsyncpa %s428, 1
    %430 = vsyncpa [#allocation9], 1
    %s431 = scalar_lea.sflag [#allocation9], 1
    %432 = vsyncpa %s431, 1

</llo_original>
